<compile_context>
chip_gen: v5e
topology: v5e:2x2
jax: 0.10.0
libtpu: 0.0.40
codegen_flags: <defaults>
</compile_context>

<pallas_src>
import jax
import jax.numpy as jnp
from jax.experimental import pallas as pl
from jax.experimental.pallas import tpu as pltpu


def _round_up(v, m):
    return ((v + m - 1) // m) * m


def _tpu_vmem_capacity_bytes():
    """Physical VMEM per TensorCore; conservative 64 MiB (v7x) if query fails."""
    try:
        cap = int(pltpu.get_tpu_info().vmem_capacity_bytes)
        if cap > 0:
            return cap
    except Exception:
        pass
    return 64 * 1024 * 1024


def _pick_hw_tile(hw, c, itemsize, target_block_bytes):
    """Largest multiple-of-128 lane tile within the per-block byte budget."""
    hw_pad = _round_up(hw, 128)
    cap = max(128, (target_block_bytes // max(1, c * itemsize)) // 128 * 128)
    return min(hw_pad, cap)


def _channel_mlp(mx, avg, w1f, w2f):
    """relu(W1 @ [mx|avg]) folded into one dot, then W2, then sigmoid.

    Column-vector form so the PyTorch fc1 (Cr, C) / fc2 (C, Cr) weights are
    used untransposed.  mx/avg: (C, 1) f32.  Returns (C, 1) f32 attention.
    """
    c = mx.shape[0]
    col = jax.lax.broadcasted_iota(jnp.int32, (c, 2), 1)
    pooled = jnp.where(col == 0, mx, avg)                                   # (C, 2)
    h = jnp.maximum(jnp.dot(w1f, pooled, preferred_element_type=jnp.float32), 0.0)  # (Cr, 2)
    hsum = jnp.sum(h, axis=1, keepdims=True)       # relu(W1 mx) + relu(W1 avg): (Cr, 1)
    logits = jnp.dot(w2f, hsum, preferred_element_type=jnp.float32)         # (C, 1)
    return jax.nn.sigmoid(logits)


def cbam_block_forward(x_nchw, w1, w2, *, hw_tile=None, fuse=None, donate_x=False):
    """x_nchw: (B, C, H, W); w1: (C//r, C) [fc1 weight]; w2: (C, C//r) [fc2 weight]."""
    b, c, h, w = x_nchw.shape
    hw = h * w
    cr = w1.shape[0]
    itemsize = x_nchw.dtype.itemsize
    inv_hw = 1.0 / float(hw)

    # Pure reshape — no data movement, keeps NCHW memory order.
    x = x_nchw.reshape(b, c, hw)

    # Generation-aware VMEM budgets (v7x: 64 MiB phys, v5e/v6e: 128 MiB).
    vmem_cap = _tpu_vmem_capacity_bytes()
    vmem_limit = min((vmem_cap * 3) // 4, 100 * 1024 * 1024)     # 48 MiB v7x / 96 MiB v6e
    target_block_bytes = max(2 * 1024 * 1024, vmem_cap // 16)    # 4 MiB v7x / 8 MiB v6e
    slab_bytes = c * hw * itemsize
    if fuse is None:
        fuse = slab_bytes <= vmem_cap // 8                       # 8 MiB v7x / 16 MiB v6e

    # --------------------------- fused single-pass path ----------------------
    if fuse:
        def fused_kernel(x_ref, w1_ref, w2_ref, o_ref):
            # x_ref/o_ref: (c, hw); w1_ref: (cr, c); w2_ref: (c, cr)
            xt = x_ref[...]
            mx = jnp.max(xt, axis=1, keepdims=True).astype(jnp.float32)        # (c, 1)
            avg = jnp.sum(xt, axis=1, dtype=jnp.float32, keepdims=True) * inv_hw
            att = _channel_mlp(mx, avg,
                               w1_ref[...].astype(jnp.float32),
                               w2_ref[...].astype(jnp.float32))                # (c, 1)
            # Multiply in the input dtype (matches a same-dtype PyTorch module).
            o_ref[...] = xt * att.astype(o_ref.dtype)

        out = pl.pallas_call(
            fused_kernel,
            out_shape=jax.ShapeDtypeStruct((b, c, hw), x.dtype),
            grid_spec=pltpu.PrefetchScalarGridSpec(
                num_scalar_prefetch=0,
                grid=(b,),
                in_specs=[
                    pl.BlockSpec((None, c, hw), lambda i: (i, 0, 0)),
                    pl.BlockSpec((cr, c), lambda i: (0, 0)),
                    pl.BlockSpec((c, cr), lambda i: (0, 0)),
                ],
                out_specs=pl.BlockSpec((None, c, hw), lambda i: (i, 0, 0)),
            ),
            compiler_params=pltpu.CompilerParams(
                dimension_semantics=("parallel",),
                vmem_limit_bytes=vmem_limit),
        )(x, w1, w2)
        return out.reshape(b, c, h, w)

    # ----------------------- two-pass fallback (large slabs) -----------------
    if hw_tile is None:
        hw_tile = _pick_hw_tile(hw, c, itemsize, target_block_bytes)
    # Never silently fall back to a full-extent block: round to 128 and cap.
    hw_tile = min(_round_up(max(int(hw_tile), 128), 128), _round_up(hw, 128))
    n_tiles = pl.cdiv(hw, hw_tile)
    needs_mask = (hw % hw_tile) != 0   # only the last tile overhangs the array

    # pass 1: streaming pooled max / avg over HW tiles + once-per-batch MLP
    def pool_mlp_kernel(x_ref, w1_ref, w2_ref, att_ref, max_sc, sum_sc):
        # x_ref: (c, hw_tile); att_ref: (c, 1) f32
        j = pl.program_id(1)
        xt = x_ref[...]
        if needs_mask:
            lane = jax.lax.broadcasted_iota(jnp.int32, xt.shape, 1) + j * hw_tile
            valid = lane < hw
            xt_max = jnp.where(valid, xt, jnp.asarray(-jnp.inf, dtype=xt.dtype))
            xt_sum = jnp.where(valid, xt, jnp.zeros((), dtype=xt.dtype))
        else:
            xt_max = xt
            xt_sum = xt
        tile_max = jnp.max(xt_max, axis=1, keepdims=True).astype(jnp.float32)   # (c, 1)
        tile_sum = jnp.sum(xt_sum, axis=1, dtype=jnp.float32, keepdims=True)    # (c, 1)

        @pl.when(j == 0)
        def _():
            max_sc[...] = tile_max
            sum_sc[...] = tile_sum

        @pl.when(j > 0)
        def _():
            max_sc[...] = jnp.maximum(max_sc[...], tile_max)
            sum_sc[...] = sum_sc[...] + tile_sum

        @pl.when(j == pl.num_programs(1) - 1)
        def _():
            att_ref[...] = _channel_mlp(max_sc[...], sum_sc[...] * inv_hw,
                                        w1_ref[...].astype(jnp.float32),
                                        w2_ref[...].astype(jnp.float32))

    att = pl.pallas_call(
        pool_mlp_kernel,
        out_shape=jax.ShapeDtypeStruct((b, c, 1), jnp.float32),
        grid_spec=pltpu.PrefetchScalarGridSpec(
            num_scalar_prefetch=0,
            grid=(b, n_tiles),
            in_specs=[
                pl.BlockSpec((None, c, hw_tile), lambda i, j: (i, 0, j)),
                pl.BlockSpec((cr, c), lambda i, j: (0, 0)),
                pl.BlockSpec((c, cr), lambda i, j: (0, 0)),
            ],
            out_specs=pl.BlockSpec((None, c, 1), lambda i, j: (i, 0, 0)),
            scratch_shapes=[pltpu.VMEM((c, 1), jnp.float32),
                            pltpu.VMEM((c, 1), jnp.float32)],
        ),
        compiler_params=pltpu.CompilerParams(
            dimension_semantics=("parallel", "arbitrary"),
            vmem_limit_bytes=vmem_limit),
    )(x, w1, w2)

    # pass 2: mem-bound per-channel rescale (overhang lanes clipped on writeback)
    def rescale_kernel(x_ref, att_ref, o_ref):
        o_ref[...] = x_ref[...] * att_ref[...].astype(o_ref.dtype)

    out = pl.pallas_call(
        rescale_kernel,
        out_shape=jax.ShapeDtypeStruct((b, c, hw), x.dtype),
        grid_spec=pltpu.PrefetchScalarGridSpec(
            num_scalar_prefetch=0,
            grid=(b, n_tiles),
            in_specs=[
                pl.BlockSpec((None, c, hw_tile), lambda i, j: (i, 0, j)),
                pl.BlockSpec((None, c, 1), lambda i, j: (i, 0, 0)),
            ],
            out_specs=pl.BlockSpec((None, c, hw_tile), lambda i, j: (i, 0, j)),
        ),
        input_output_aliases=({0: 0} if donate_x else {}),
        compiler_params=pltpu.CompilerParams(
            dimension_semantics=("parallel", "parallel"),
            vmem_limit_bytes=vmem_limit),
    )(x, att)

    return out.reshape(b, c, h, w)


def _reference(x, w1, w2):
    b, c, h, w = x.shape
    flat = x.reshape(b, c, h * w)
    mx = jnp.max(flat, axis=-1)
    avg = jnp.mean(flat, axis=-1)
    h_max = jnp.maximum(mx @ w1.T, 0.0)
    h_avg = jnp.maximum(avg @ w1.T, 0.0)
    att = jax.nn.sigmoid(h_max @ w2.T + h_avg @ w2.T)
    return x * att[:, :, None, None]


if __name__ == "__main__":
    # Case 1: module-default smoke shape (B=2, C=4, ratio=4, 16x16) -> fused path.
    B, C, H, W, ratio = 2, 4, 16, 16, 4
    Cr = max(1, C // ratio)
    kx, k1, k2 = jax.random.split(jax.random.PRNGKey(0), 3)
    x = jax.random.normal(kx, (B, C, H, W), dtype=jnp.float32)
    w1 = (jax.random.uniform(k1, (Cr, C), dtype=jnp.float32) - 0.5) * (2.0 / C) ** 0.5
    w2 = (jax.random.uniform(k2, (C, Cr), dtype=jnp.float32) - 0.5) * (2.0 / Cr) ** 0.5

    out = jax.block_until_ready(cbam_block_forward(x, w1, w2))
    ref = _reference(x, w1, w2)
    assert out.shape == (B, C, H, W)
    assert jnp.allclose(out, ref, rtol=1e-5, atol=1e-4), "fused path mismatch"

    # Case 2: HW=144 (not a multiple of 128), forced two-pass streaming path with
    # hw_tile=128 -> exercises the cdiv grid, masked last tile and accumulators.
    B2, C2, H2, W2, r2 = 2, 8, 12, 12, 4
    Cr2 = max(1, C2 // r2)
    kx2, k12, k22 = jax.random.split(jax.random.PRNGKey(0), 3)
    x2 = jax.random.normal(kx2, (B2, C2, H2, W2), dtype=jnp.float32)
    w12 = (jax.random.uniform(k12, (Cr2, C2), dtype=jnp.float32) - 0.5) * (2.0 / C2) ** 0.5
    w22 = (jax.random.uniform(k22, (C2, Cr2), dtype=jnp.float32) - 0.5) * (2.0 / Cr2) ** 0.5

    out2 = jax.block_until_ready(
        cbam_block_forward(x2, w12, w22, fuse=False, hw_tile=128))
    ref2 = _reference(x2, w12, w22)
    assert jnp.allclose(out2, ref2, rtol=1e-5, atol=1e-4), "two-pass path mismatch"

    # Case 3: same odd-HW shape through the fused path (full-extent lane block).
    out3 = jax.block_until_ready(cbam_block_forward(x2, w12, w22, fuse=True))
    assert jnp.allclose(out3, ref2, rtol=1e-5, atol=1e-4), "fused odd-HW mismatch"

    print("KERNEL_OK")
</pallas_src>

<mosaic_0001>
module attributes {stable_mosaic.version = 11 : i64} {
  func.func @fused_kernel(%arg0: i32, %arg1: memref<1x4x256xf32, #tpu.memory_space<vmem>>, %arg2: memref<1x4xf32, #tpu.memory_space<vmem>>, %arg3: memref<4x1xf32, #tpu.memory_space<vmem>>, %arg4: memref<1x4x256xf32, #tpu.memory_space<vmem>>) attributes {dimension_semantics = [#tpu.dimension_semantics<parallel>], iteration_bounds = array<i64: 2>, scalar_prefetch = 0 : i64, scratch_operands = 0 : i64, tpu.core_type = #tpu.core_type<tc>, window_params = [{transform_indices = @transform_0, window_bounds = array<i64: 1, 4, 256>}, {pipeline_mode = #tpu.pipeline_mode<synchronous>, transform_indices = @transform_1, window_bounds = array<i64: 1, 4>}, {pipeline_mode = #tpu.pipeline_mode<synchronous>, transform_indices = @transform_2, window_bounds = array<i64: 4, 1>}, {transform_indices = @transform_3, window_bounds = array<i64: 1, 4, 256>}]} {
    %c0 = arith.constant 0 : index
    %c0_0 = arith.constant 0 : index
    %c0_1 = arith.constant 0 : index
    %0 = vector.load %arg1[%c0, %c0_0, %c0_1] : memref<1x4x256xf32, #tpu.memory_space<vmem>>, vector<1x4x256xf32>
    %1 = vector.shape_cast %0 : vector<1x4x256xf32> to vector<4x256xf32>
    %cst = arith.constant dense<0xFF800000> : vector<4xf32>
    %2 = vector.multi_reduction <maximumf>, %1, %cst [1] : vector<4x256xf32> to vector<4xf32>
    %3 = vector.shape_cast %2 : vector<4xf32> to vector<4x1xf32>
    %cst_2 = arith.constant dense<0.000000e+00> : vector<4xf32>
    %4 = vector.multi_reduction <add>, %1, %cst_2 [1] : vector<4x256xf32> to vector<4xf32>
    %5 = vector.shape_cast %4 : vector<4xf32> to vector<4x1xf32>
    %cst_3 = arith.constant 3.906250e-03 : f32
    %6 = vector.broadcast %cst_3 : f32 to vector<4x1xf32>
    %7 = arith.mulf %5, %6 : vector<4x1xf32>
    %c0_4 = arith.constant 0 : index
    %c0_5 = arith.constant 0 : index
    %8 = vector.load %arg2[%c0_4, %c0_5] : memref<1x4xf32, #tpu.memory_space<vmem>>, vector<1x4xf32>
    %c0_6 = arith.constant 0 : index
    %c0_7 = arith.constant 0 : index
    %9 = vector.load %arg3[%c0_6, %c0_7] : memref<4x1xf32, #tpu.memory_space<vmem>>, vector<4x1xf32>
    %10 = tpu.iota {dimensions = array<i32: 1>} : vector<4x2xi32>
    %c0_i32 = arith.constant 0 : i32
    %11 = vector.broadcast %c0_i32 : i32 to vector<4x2xi32>
    %12 = arith.cmpi eq, %10, %11 : vector<4x2xi32>
    %13 = vector.shape_cast %3 : vector<4x1xf32> to vector<4x1xf32>
    %14 = vector.broadcast %13 : vector<4x1xf32> to vector<4x2xf32>
    %15 = vector.shape_cast %7 : vector<4x1xf32> to vector<4x1xf32>
    %16 = vector.broadcast %15 : vector<4x1xf32> to vector<4x2xf32>
    %17 = arith.select %12, %14, %16 : vector<4x2xi1>, vector<4x2xf32>
    %cst_8 = arith.constant dense<0.000000e+00> : vector<1x2xf32>
    %18 = tpu.matmul %8, %17, %cst_8 {dimension_numbers = #tpu.dot_dimension_numbers<[1], [0], [0], [1], [0, 0, 1, 1], [], []>} : vector<1x4xf32>, vector<4x2xf32>, vector<1x2xf32> -> vector<1x2xf32>
    %cst_9 = arith.constant 0.000000e+00 : f32
    %19 = vector.broadcast %cst_9 : f32 to vector<1x2xf32>
    %20 = arith.maximumf %18, %19 : vector<1x2xf32>
    %cst_10 = arith.constant dense<0.000000e+00> : vector<1xf32>
    %21 = vector.multi_reduction <add>, %20, %cst_10 [1] : vector<1x2xf32> to vector<1xf32>
    %22 = vector.shape_cast %21 : vector<1xf32> to vector<1x1xf32>
    %cst_11 = arith.constant dense<0.000000e+00> : vector<4x1xf32>
    %23 = tpu.matmul %9, %22, %cst_11 {dimension_numbers = #tpu.dot_dimension_numbers<[1], [0], [0], [1], [0, 0, 1, 1], [], []>} : vector<4x1xf32>, vector<1x1xf32>, vector<4x1xf32> -> vector<4x1xf32>
    %24 = arith.negf %23 : vector<4x1xf32>
    %25 = math.exp %24 : vector<4x1xf32>
    %cst_12 = arith.constant 1.000000e+00 : f32
    %26 = vector.broadcast %cst_12 : f32 to vector<4x1xf32>
    %27 = arith.addf %26, %25 : vector<4x1xf32>
    %28 = arith.divf %26, %27 : vector<4x1xf32>
    %29 = vector.broadcast %28 : vector<4x1xf32> to vector<4x256xf32>
    %30 = arith.mulf %1, %29 : vector<4x256xf32>
    %c0_13 = arith.constant 0 : index
    %c0_14 = arith.constant 0 : index
    %c0_15 = arith.constant 0 : index
    %31 = vector.load %arg4[%c0_13, %c0_14, %c0_15] : memref<1x4x256xf32, #tpu.memory_space<vmem>>, vector<1x4x256xf32>
    %32 = vector.shape_cast %31 : vector<1x4x256xf32> to vector<4x256xf32>
    %33 = vector.shape_cast %30 : vector<4x256xf32> to vector<1x4x256xf32>
    tpu.vector_store %arg4[%c0_13, %c0_14, %c0_15], %33 {strides = array<i32>} : memref<1x4x256xf32, #tpu.memory_space<vmem>>, vector<1x4x256xf32>,
    return
  }
  func.func @transform_0(%arg0: i32) -> (i32, i32, i32) {
    %c0_i32 = arith.constant 0 : i32
    %c0_i32_0 = arith.constant 0 : i32
    %c0_i32_1 = arith.constant 0 : i32
    return %arg0, %c0_i32, %c0_i32_0 : i32, i32, i32
  }
  func.func @transform_1(%arg0: i32) -> (i32, i32) {
    %c0_i32 = arith.constant 0 : i32
    %c0_i32_0 = arith.constant 0 : i32
    %c0_i32_1 = arith.constant 0 : i32
    return %c0_i32, %c0_i32_0 : i32, i32
  }
  func.func @transform_2(%arg0: i32) -> (i32, i32) {
    %c0_i32 = arith.constant 0 : i32
    %c0_i32_0 = arith.constant 0 : i32
    %c0_i32_1 = arith.constant 0 : i32
    return %c0_i32, %c0_i32_0 : i32, i32
  }
  func.func @transform_3(%arg0: i32) -> (i32, i32, i32) {
    %c0_i32 = arith.constant 0 : i32
    %c0_i32_0 = arith.constant 0 : i32
    %c0_i32_1 = arith.constant 0 : i32
    return %arg0, %c0_i32, %c0_i32_0 : i32, i32, i32
  }
}

</mosaic_0001>

<llo_original>
// kernel: tpu_custom_call.1
$region0: #{tpu_custom_call.1}
  #allocation0 [shape = 'u32[]', space=smem, size = 0x4, offset = 0x4, fixed_abs, tag = 'smem constant byte address 0x4 - core index']
  #allocation1 [shape = 'u32[72,128]{1,0:T(1,128)}', space=vmem, size = 0x9000, scoped, tag = 'internal scratch']
  %s0 = inlined_call_operand.hbm [shape: f32[2,4,256], index: 0, kind: input, shape index: {}]
  %s1 = inlined_call_operand.vmem [shape: f32[1,4], index: 1, kind: input, shape index: {}]
  %s2 = inlined_call_operand.vmem [shape: f32[4,1], index: 2, kind: input, shape index: {}]
  %s3 = inlined_call_operand.hbm [shape: f32[2,4,256], index: 3, kind: output, shape index: {}]
  %s4 = sld [smem:[#allocation0]]
  $region49: #{tpu_custom_call.1} parent=0
    _
  %s6 = ssub.s32 1, %s4
  %s7 = scalar_select 0, %s6, %s4
  $region1: #{tpu_custom_call.1} parent=0
    #allocation2 [shape = 'u8[8192]{0}', space=vmem, size = 0x2000, scoped, tag = 'input window, operand 0']
    #allocation3 [shape = 's32[2]{0}', space=sflag, size = 0x8, scoped, tag = 'scoped memory for tpu_custom_call.1']
    #allocation4 [shape = 's32[2]{0}', space=sflag, size = 0x8, scoped, tag = 'scoped memory for tpu_custom_call.1']
    #allocation5 [shape = 'u8[8192]{0}', space=vmem, size = 0x2000, scoped, tag = 'output window, operand 0']
    %8 = vsyncpa [#allocation3], 0
    %s9 = scalar_lea.sflag [#allocation3], 1
    %10 = vsyncpa %s9, 0
    %11 = vsyncpa [#allocation4], 0
    %s12 = scalar_lea.sflag [#allocation4], 1
    %13 = vsyncpa %s12, 0
    loop: start=0, step=1, limit=4
    $region2: #{tpu_custom_call.1} parent=1 // loop_pre_header
      _
    $region3: #{tpu_custom_call.1} parent=1 // loop_header
      %s15 = sphi 0, %s19
      %p16 = scmp.ge.s32.totalorder %s15, 4
      %s25 = sphi 0, %s27
      %s28 = sphi 0, %s25
      %s29 = sphi 0, %s28
      %s45 = sphi 0, %s29
      %s49 = sphi 0, %s49
      %s51 = sphi 0, %s49
      %s52 = sphi 0, %s51
      %s66 = sphi 0, %s52
      %s70 = sphi 0, %s70
      %s72 = sphi 0, %s70
      %s73 = sphi 0, %s72
      %s87 = sphi 0, %s73
      %s93 = sphi 0, %s95
      %s96 = sphi 0, %s93
      %s97 = sphi 0, %s96
      %s113 = sphi 0, %s97
    $region4: #{tpu_custom_call.1} parent=1 // loop_header_branch
      %18 = sbr.rel (%p16) target = $region8
    $region5: #{tpu_custom_call.1} parent=1 // loop_body
      %s20 = ssub.s32 %s15, 1
      %s21 = ssub.s32 %s15, 2
      %s22 = sadd.s32 %s15, 1
      %s23 = ssub.s32 %s15, %s22
      %p24 = scmp.eq.s32.totalorder %s23, 0
      %s26 = sadd.s32 %s25, 1
      %s27 = scalar_select %p24, %s25, %s26
      %p30 = pneg %p24
      %p31 = scmp.eq.s32.totalorder %s15, 1
      %p32 = por %p30, %p31
      %p33 = scmp.ne.s32.totalorder %s25, %s28
      %p34 = scmp.eq.s32.totalorder %s15, 0
      %p35 = por %p33, %p34
      %p36 = scmp.ne.s32.totalorder %s25, %s28
      %p37 = scmp.eq.s32.totalorder %s20, 1
      %p38 = por %p36, %p37
      %p39 = scmp.ne.s32.totalorder %s28, %s29
      %p40 = scmp.eq.s32.totalorder %s20, 0
      %p41 = por %p39, %p40
      %p42 = scmp.ne.s32.totalorder %s28, %s29
      %p43 = scmp.eq.s32.totalorder %s21, 1
      %p44 = por %p42, %p43
      %p46 = scmp.ne.s32.totalorder %s29, %s45
      %p47 = scmp.eq.s32.totalorder %s21, 0
      %p48 = por %p46, %p47
      %s50 = sadd.s32 %s49, 1
      %p53 = scmp.eq.s32.totalorder %s15, 1
      %p54 = scmp.ne.s32.totalorder %s49, %s51
      %p55 = scmp.eq.s32.totalorder %s15, 0
      %p56 = por %p54, %p55
      %p57 = scmp.ne.s32.totalorder %s49, %s51
      %p58 = scmp.eq.s32.totalorder %s20, 1
      %p59 = por %p57, %p58
      %p60 = scmp.ne.s32.totalorder %s51, %s52
      %p61 = scmp.eq.s32.totalorder %s20, 0
      %p62 = por %p60, %p61
      %p63 = scmp.ne.s32.totalorder %s51, %s52
      %p64 = scmp.eq.s32.totalorder %s21, 1
      %p65 = por %p63, %p64
      %p67 = scmp.ne.s32.totalorder %s52, %s66
      %p68 = scmp.eq.s32.totalorder %s21, 0
      %p69 = por %p67, %p68
      %s71 = sadd.s32 %s70, 1
      %p74 = scmp.eq.s32.totalorder %s15, 1
      %p75 = scmp.ne.s32.totalorder %s70, %s72
      %p76 = scmp.eq.s32.totalorder %s15, 0
      %p77 = por %p75, %p76
      %p78 = scmp.ne.s32.totalorder %s70, %s72
      %p79 = scmp.eq.s32.totalorder %s20, 1
      %p80 = por %p78, %p79
      %p81 = scmp.ne.s32.totalorder %s72, %s73
      %p82 = scmp.eq.s32.totalorder %s20, 0
      %p83 = por %p81, %p82
      %p84 = scmp.ne.s32.totalorder %s72, %s73
      %p85 = scmp.eq.s32.totalorder %s21, 1
      %p86 = por %p84, %p85
      %p88 = scmp.ne.s32.totalorder %s73, %s87
      %p89 = scmp.eq.s32.totalorder %s21, 0
      %p90 = por %p88, %p89
      %s91 = ssub.s32 %s15, %s22
      %p92 = scmp.eq.s32.totalorder %s91, 0
      %s94 = sadd.s32 %s93, 1
      %s95 = scalar_select %p92, %s93, %s94
      %p98 = pneg %p92
      %p99 = scmp.eq.s32.totalorder %s15, 1
      %p100 = por %p98, %p99
      %p101 = scmp.ne.s32.totalorder %s93, %s96
      %p102 = scmp.eq.s32.totalorder %s15, 0
      %p103 = por %p101, %p102
      %p104 = scmp.ne.s32.totalorder %s93, %s96
      %p105 = scmp.eq.s32.totalorder %s20, 1
      %p106 = por %p104, %p105
      %p107 = scmp.ne.s32.totalorder %s96, %s97
      %p108 = scmp.eq.s32.totalorder %s20, 0
      %p109 = por %p107, %p108
      %p110 = scmp.ne.s32.totalorder %s96, %s97
      %p111 = scmp.eq.s32.totalorder %s21, 1
      %p112 = por %p110, %p111
      %p114 = scmp.ne.s32.totalorder %s97, %s113
      %p115 = scmp.eq.s32.totalorder %s21, 0
      %p116 = por %p114, %p115
      %p117 = scmp.le.s32.totalorder 1, %s15
      %p118 = scmp.lt.s32.totalorder %s15, 3
      %p119 = pnand %p117, %p118
      %p120 = pneg %p119
      // Predicated region
      $region9: #{tpu_custom_call.1} parent=5 // pred_check
        _
      $region10: #{tpu_custom_call.1} parent=5 // pred_check_branch
        %122 = sbr.rel (%p119) target = $region12
      $region11: #{tpu_custom_call.1} parent=5 // pred_region
        %s123 = ssub.s32 %s15, 1
        // Predicated region
        $region13: #{tpu_custom_call.1} parent=11 // pred_check
          %p124 = pneg %p62
        $region14: #{tpu_custom_call.1} parent=11 // pred_check_branch
          %126 = sbr.rel (%p124) target = $region16
        $region15: #{tpu_custom_call.1} parent=11 // pred_region
          _
        $region16: #{tpu_custom_call.1} parent=11 // pred_fallthru
          _
        // Predicated region
        $region17: #{tpu_custom_call.1} parent=11 // pred_check
          %p127 = pneg %p83
        $region18: #{tpu_custom_call.1} parent=11 // pred_check_branch
          %129 = sbr.rel (%p127) target = $region20
        $region19: #{tpu_custom_call.1} parent=11 // pred_region
          _
        $region20: #{tpu_custom_call.1} parent=11 // pred_fallthru
          _
      $region12: #{tpu_custom_call.1} parent=5 // pred_fallthru
        _
      %p130 = scmp.lt.s32.totalorder %s15, 2
      // Predicated region
      $region21: #{tpu_custom_call.1} parent=5 // pred_check
        %p131 = pneg %p130
      $region22: #{tpu_custom_call.1} parent=5 // pred_check_branch
        %133 = sbr.rel (%p131) target = $region24
      $region23: #{tpu_custom_call.1} parent=5 // pred_region
        // Predicated region
        $region25: #{tpu_custom_call.1} parent=23 // pred_check
          %p134 = pneg %p35
        $region26: #{tpu_custom_call.1} parent=23 // pred_check_branch
          %136 = sbr.rel (%p134) target = $region28
        $region27: #{tpu_custom_call.1} parent=23 // pred_region
          %s137 = sand.u32 %s25, 1
          %s138 = scalar_lea.sflag [#allocation3], %s137
          %s139 = sand.u32 %s25, 1
          %s140 = smul.addr %s139, 8
          %s141 = scalar_lea.vmem [#allocation2], %s140
          %143 = vsyncadd %s138, 0
          %s144 = smul.addr %s15, 2
          %s145 = smul.addr %s144, 4
          %s146 = scalar_lea.hbm %s0, %s145
          %s148 = sshll.u32 %s146, 4
          %s149 = int_to_ptr.hbm [resolvable:$true] %s148
          %s150 = sshll.u32 %s141, 4
          %s151 = int_to_ptr.vmem [resolvable:$true] %s150
          %153 = dma.hbm_to_vmem [thread:$0]  %s149, 128, %s151, %s138
        $region28: #{tpu_custom_call.1} parent=23 // pred_fallthru
          _
      $region24: #{tpu_custom_call.1} parent=5 // pred_fallthru
        _
      %p154 = scmp.le.s32.totalorder 1, %s15
      %p155 = scmp.lt.s32.totalorder %s15, 3
      %p156 = pnand %p154, %p155
      %p157 = pneg %p156
      // Predicated region
      $region29: #{tpu_custom_call.1} parent=5 // pred_check
        _
      $region30: #{tpu_custom_call.1} parent=5 // pred_check_branch
        %159 = sbr.rel (%p156) target = $region32
      $region31: #{tpu_custom_call.1} parent=5 // pred_region
        %s160 = ssub.s32 %s15, 1
        %s161 = sand.u32 %s28, 1
        %s162 = scalar_lea.sflag [#allocation3], %s161
        %s163 = sand.u32 %s28, 1
        %s164 = smul.addr %s163, 8
        %s165 = scalar_lea.vmem [#allocation2], %s164
        // Predicated region
        $region33: #{tpu_custom_call.1} parent=31 // pred_check
          %p166 = pneg %p41
        $region34: #{tpu_custom_call.1} parent=31 // pred_check_branch
          %168 = sbr.rel (%p166) target = $region36
        $region35: #{tpu_custom_call.1} parent=31 // pred_region
          %170 = dma.done %s162, 128
        $region36: #{tpu_custom_call.1} parent=31 // pred_fallthru
          _
        %s171 = sand.u32 %s28, 1
        %s172 = scalar_lea.sflag [#allocation3], %s171
        %s173 = sand.u32 %s28, 1
        %s174 = smul.addr %s173, 8
        %s175 = scalar_lea.vmem [#allocation2], %s174
        %p176 = pneg %p41
        %p177 = pneg %p38
        %p178 = pneg %p62
        %p179 = pneg %p59
        %p180 = pneg %p83
        %p181 = pneg %p80
        %p182 = pneg %p109
        %p183 = pneg %p106
        %s184 = sand.u32 %s96, 1
        %s185 = scalar_lea.sflag [#allocation4], %s184
        %s186 = sand.u32 %s96, 1
        %s187 = smul.addr %s186, 8
        %s188 = scalar_lea.vmem [#allocation5], %s187
        %v189 = vld [vmem:[%s165] sm:$0xff]
        %191 = vst [vmem:[#allocation1] ss:$2 sm:$0xff] %v189
        %v192 = vld.sshfl [vmem:[#allocation1] sm:$0xff pattern:$0x75316420]
        %v193 = vld.sshfl [vmem:[#allocation1 + $0x8] sm:$0xff pattern:$0x75316420]
        %vm196 = vcmask 1043456
        %v197 = vsel %vm196, %v192, -inf
        %v198 = vsel %vm196, %v193, -inf
        %v199 = vmax.f32 %v197, %v198
        %200 = vmax.xlane.f32.xlu0 %v199
        %v201 = vpop.xlane.xlu0 %200
        %202 = vst [vmem:[#allocation1] ss:$2 sm:$0xff] %v189
        %v203 = vld.sshfl [vmem:[#allocation1] sm:$0xff pattern:$0x75316420]
        %v204 = vld.sshfl [vmem:[#allocation1 + $0x8] sm:$0xff pattern:$0x75316420]
        %v207 = vsel %vm196, %v203, 0.0
        %v208 = vsel %vm196, %v204, 0.0
        %v209 = vadd.f32 %v207, %v208
        %210 = vadd.xlane.f32.xlu0 %v209
        %v211 = vpop.xlane.xlu0 %210
        %v212 = vmul.f32 %v211, 0.00390625
        %v213 = vld [vmem:[%s1] sm:$0x1]
        %v214 = vld [vmem:[%s2] sm:$0xf]
        %v215 = vlaneseq
        %v216 = vand.u32 %v215, 127
        %vm217 = vcmp.eq.s32.totalorder %v216, 0
        %v218 = vsel %vm217, %v201, %v212
        %vm219 = vcmask 31744
        %v221 = vsel %vm219, %v213, 0
        %v224 = vsel %vm196, %v218, 0
        %226 = vmatpush.msra.mxu0 0.0
        %227 = vmatpush.msra.mxu0 0.0
        %228 = vmatpush.msra.mxu0 0.0
        %229 = vmatpush.msra.mxu0 0.0
        %230 = vmatpush.msra.mxu0 0.0
        %231 = vmatpush.msra.mxu0 0.0
        %232 = vmatpush.msra.mxu0 0.0
        %233 = vmatpush.msra.mxu0 0.0
        %234 = vmatpush.msra.mxu0 0.0
        %235 = vmatpush.msra.mxu0 0.0
        %236 = vmatpush.msra.mxu0 0.0
        %237 = vmatpush.msra.mxu0 0.0
        %238 = vmatpush.msra.mxu0 0.0
        %239 = vmatpush.msra.mxu0 0.0
        %240 = vmatpush.msra.mxu0 0.0
        %241 = vmatpush.msra.mxu0 %v224
        %242 = vmatmul.f32.gmra.mxu0 %v221
        %v243 = vpop.f32.mrf.mxu0
        %v244 = vadd.f32 0.0, %v243
        %245 = vdwg.mxu0
        %v246 = vmax.f32 %v244, 0.0
        %vm247 = vcmask 8192
        %v248 = vsel %vm247, %v246, 0.0
        %249 = vadd.xlane.f32.xlu0 %v248
        %v250 = vpop.xlane.xlu0 %249
        %vm251 = vcmask 7168
        %v253 = vsel %vm251, %v214, 0
        %vm255 = vcmask 1040384
        %v257 = vsel %vm255, %v250, 0
        %259 = vmatpush.msra.mxu0 0.0
        %260 = vmatpush.msra.mxu0 0.0
        %261 = vmatpush.msra.mxu0 0.0
        %262 = vmatpush.msra.mxu0 0.0
        %263 = vmatpush.msra.mxu0 0.0
        %264 = vmatpush.msra.mxu0 0.0
        %265 = vmatpush.msra.mxu0 0.0
        %266 = vmatpush.msra.mxu0 0.0
        %267 = vmatpush.msra.mxu0 0.0
        %268 = vmatpush.msra.mxu0 0.0
        %269 = vmatpush.msra.mxu0 0.0
        %270 = vmatpush.msra.mxu0 0.0
        %271 = vmatpush.msra.mxu0 0.0
        %272 = vmatpush.msra.mxu0 0.0
        %273 = vmatpush.msra.mxu0 0.0
        %274 = vmatpush.msra.mxu0 %v257
        %275 = vmatmul.f32.gmra.mxu0 %v253
        %v276 = vpop.f32.mrf.mxu0
        %v277 = vadd.f32 0.0, %v276
        %278 = vdwg.mxu0
        %v279 = vxor.u32 %v277, 2147483648
        %v280 = vmul.f32 %v279, 1.442695
        %v281 = vpow.pop %v280
        %v282 = vadd.f32 %v281, 1.0
        %v283 = vrcp.pop %v282
        %v284 = vmul.f32 %v282, %v283
        %v285 = vsub.f32 1.0, %v284
        %v286 = vmul.f32 %v283, %v285
        %v287 = vadd.f32 %v283, %v286
        %vm288 = vweird.f32 %v282
        %vm289 = vweird.f32 %v283
        %vm290 = vmor %vm288, %vm289
        %v291 = vsel %vm290, %v283, %v287
        %v292 = vand.u32 2147483647, %v282
        %vm293 = vcmp.eq.f32.partialorder %v292, 8.507059e+37
        %v294 = vand.u32 %v282, 2147483648
        %v295 = vor.u32 1.1754944e-38, %v294
        %v296 = vsel %vm293, %v295, %v291
        %v297 = vmul.f32 1.0, %v296
        %299 = vset.pattern.permute.xlu0 0
        %300 = vperm.xlu0 %299, %v297
        %v301 = vpop.permute.xlu0 %300
        %v303 = vunpack.c.l.s4 839922192
        %v304 = vunpack.c.0.s8 %v303
        %v305 = vperm.slane %v301, %v304
        %v307 = vmul.f32 %v189, %v305
        %308 = vst [vmem:[%s188] sm:$0xff] %v307
        %s309 = sand.u32 %s96, 1
        %s310 = scalar_lea.sflag [#allocation4], %s309
        %s311 = sand.u32 %s96, 1
        %s312 = smul.addr %s311, 8
        %s313 = scalar_lea.vmem [#allocation5], %s312
        // Predicated region
        $region37: #{tpu_custom_call.1} parent=31 // pred_check
          %p314 = pneg %p106
        $region38: #{tpu_custom_call.1} parent=31 // pred_check_branch
          %316 = sbr.rel (%p314) target = $region40
        $region39: #{tpu_custom_call.1} parent=31 // pred_region
          %318 = vsyncadd %s310, 0
          %s319 = smul.addr %s20, 2
          %s320 = smul.addr %s319, 4
          %s321 = scalar_lea.hbm %s3, %s320
          %s323 = sshll.u32 %s313, 4
          %s324 = int_to_ptr.vmem [resolvable:$true] %s323
          %s325 = sshll.u32 %s321, 4
          %s326 = int_to_ptr.hbm [resolvable:$true] %s325
          %328 = dma.vmem_to_hbm [thread:$0]  %s324, 128, %s326, %s310
        $region40: #{tpu_custom_call.1} parent=31 // pred_fallthru
          _
      $region32: #{tpu_custom_call.1} parent=5 // pred_fallthru
        _
      %p329 = scmp.le.s32.totalorder 2, %s15
      // Predicated region
      $region41: #{tpu_custom_call.1} parent=5 // pred_check
        %p330 = pneg %p329
      $region42: #{tpu_custom_call.1} parent=5 // pred_check_branch
        %332 = sbr.rel (%p330) target = $region44
      $region43: #{tpu_custom_call.1} parent=5 // pred_region
        %s333 = ssub.s32 %s15, 2
        // Predicated region
        $region45: #{tpu_custom_call.1} parent=43 // pred_check
          %p334 = pneg %p112
        $region46: #{tpu_custom_call.1} parent=43 // pred_check_branch
          %336 = sbr.rel (%p334) target = $region48
        $region47: #{tpu_custom_call.1} parent=43 // pred_region
          %s337 = sand.u32 %s97, 1
          %s338 = scalar_lea.sflag [#allocation4], %s337
          %s339 = sand.u32 %s97, 1
          %s340 = smul.addr %s339, 8
          %s341 = scalar_lea.vmem [#allocation5], %s340
          %343 = dma.done %s338, 128
        $region48: #{tpu_custom_call.1} parent=43 // pred_fallthru
          _
      $region44: #{tpu_custom_call.1} parent=5 // pred_fallthru
        _
    $region6: #{tpu_custom_call.1} parent=1 // loop_footer
      %s19 = sadd.s32 1, %s15
    $region7: #{tpu_custom_call.1} parent=1 // loop_footer_branch
      %14 = sbr.rel target = $region3
    $region8: #{tpu_custom_call.1} parent=1 // loop_exit
      _
    %344 = vsyncpa [#allocation3], 1
    %s345 = scalar_lea.sflag [#allocation3], 1
    %346 = vsyncpa %s345, 1
    %347 = vsyncpa [#allocation4], 1
    %s348 = scalar_lea.sflag [#allocation4], 1
    %349 = vsyncpa %s348, 1

</llo_original>
